<compile_context>
chip_gen: v6e
topology: v6e:2x2x1
jax: 0.10.0
libtpu: 0.0.40
codegen_flags: <defaults>
</compile_context>

<pallas_src>
import jax
import jax.numpy as jnp
from jax.experimental import pallas as pl
from jax.experimental.pallas import tpu as pltpu

# Target "weights dtype" (torch.float16 analog on TPU).
WEIGHTS_DTYPE = jnp.bfloat16


def _to_weights_dtype_kernel(x_ref, w1_ref, b_ref, w2_ref, o_ref):
    # x:  [B, D_in] f32    w1: [D_in, H] bf16
    # b:  [2, H]    f32    w2: [H, H]    bf16
    # o:  [B, H] weights dtype
    # Cast x to bf16 in-kernel (tiny, avoids a separate wrapper-side XLA op).
    x_bf = x_ref[...].astype(jnp.bfloat16)
    # First layer: bf16 x bf16 -> f32 accumulate on the MXU.
    h = jnp.dot(x_bf, w1_ref[...], preferred_element_type=jnp.float32)
    h = h + b_ref[0:1, :]
    # SiLU in f32 (sigmoid goes to the EUP slot; off the DMA-bound crit path).
    h = h * jax.nn.sigmoid(h)
    # Second layer: bf16 MXU operands, f32 accumulation.
    y = jnp.dot(h.astype(jnp.bfloat16), w2_ref[...],
                preferred_element_type=jnp.float32)
    y = y + b_ref[1:2, :]
    # ToWeightsDType: `.to(self.dtype)` -- single final cast on the store.
    o_ref[...] = y.astype(o_ref.dtype)


def prepare_params(w1, b1, w2, b2):
    """One-time parameter prep (module init): cast weights to bf16 once and
    pack the two biases into a single [2, H] f32 operand.  The returned dict
    is reused across every forward call (no per-call casts)."""
    H = w1.shape[1]
    return {
        "w1": w1.astype(jnp.bfloat16),                       # [D_in, H]
        "w2": w2.astype(jnp.bfloat16),                       # [H, H]
        "b": jnp.stack([b1.astype(jnp.float32),
                        b2.astype(jnp.float32)], axis=0).reshape(2, H),
    }


def to_weights_dtype_forward(x, params, dtype=WEIGHTS_DTYPE):
    """Runs the wrapped MLP and casts the output to `dtype` in one kernel.

    Weights are stored pre-transposed: w1 is [D_in, H], w2 is [H, H], so the
    kernel does plain row-major matmuls.
    """
    B, D_in = x.shape
    w1, w2, b = params["w1"], params["w2"], params["b"]
    H = w1.shape[1]

    itemsize_out = jnp.dtype(dtype).itemsize
    # Accurate advisory bytes: f32 x, bf16 weights, f32 packed biases, output.
    bytes_accessed = (
        x.size * x.dtype.itemsize
        + w1.size * 2 + w2.size * 2
        + b.size * 4
        + B * H * itemsize_out
    )
    cost = pl.CostEstimate(
        flops=2 * B * H * (D_in + H),
        transcendentals=B * H,          # sigmoid in SiLU
        bytes_accessed=bytes_accessed,
    )

    # Gridless, single-buffered, single-TC: every operand lives whole in VMEM.
    # TODO(synk): if H is ever scaled so w2 approaches ~32 MiB (H >~ 4096),
    # raise vmem_limit_bytes or tile only the output-column dim (v7x: 64 MiB
    # physical VMEM).
    vmem_spec = pl.BlockSpec(memory_space=pltpu.MemorySpace.VMEM)

    return pl.pallas_call(
        _to_weights_dtype_kernel,
        out_shape=jax.ShapeDtypeStruct((B, H), dtype),
        in_specs=[vmem_spec, vmem_spec, vmem_spec, vmem_spec],
        out_specs=vmem_spec,
        cost_estimate=cost,
    )(x, w1, b, w2)


def reference_forward(x, w1, b1, w2, b2, dtype=WEIGHTS_DTYPE):
    """Pure-JAX reference mirroring the kernel's bf16-operand / f32-acc path."""
    x_bf = x.astype(jnp.bfloat16).astype(jnp.float32)
    w1_bf = w1.astype(jnp.bfloat16).astype(jnp.float32)
    w2_bf = w2.astype(jnp.bfloat16).astype(jnp.float32)
    h = x_bf @ w1_bf + b1.astype(jnp.float32)
    h = h * jax.nn.sigmoid(h)
    h = h.astype(jnp.bfloat16).astype(jnp.float32)
    y = h @ w2_bf + b2.astype(jnp.float32)
    return y.astype(dtype)


if __name__ == "__main__":
    # Small shapes consistent with TimestepEmbedding(16, H) usage.
    B, D_IN, H = 8, 16, 256

    key = jax.random.PRNGKey(0)
    kx, k1, k2, k3, k4 = jax.random.split(key, 5)

    x = jax.random.normal(kx, (B, D_IN), dtype=jnp.float32)
    # Deterministic "init" of the wrapped module's parameters.
    w1 = jax.random.normal(k1, (D_IN, H), dtype=jnp.float32) * 0.05
    b1 = jax.random.normal(k2, (H,), dtype=jnp.float32) * 0.01
    w2 = jax.random.normal(k3, (H, H), dtype=jnp.float32) * 0.05
    b2 = jax.random.normal(k4, (H,), dtype=jnp.float32) * 0.01

    # One-time prep (module init) -- reused across every forward call.
    params = prepare_params(w1, b1, w2, b2)
    params = jax.tree_util.tree_map(jax.block_until_ready, params)

    out = to_weights_dtype_forward(x, params)
    out = jax.block_until_ready(out)

    ref = reference_forward(x, w1, b1, w2, b2)
    assert out.shape == (B, H)
    assert out.dtype == WEIGHTS_DTYPE
    assert jnp.allclose(out.astype(jnp.float32),
                        ref.astype(jnp.float32),
                        atol=2e-2, rtol=2e-2)

    print("KERNEL_OK")
</pallas_src>

<mosaic_0001>
module attributes {stable_mosaic.version = 11 : i64} {
  func.func @_to_weights_dtype_kernel(%arg0: memref<8x16xf32, #tpu.memory_space<vmem>>, %arg1: memref<16x256xbf16, #tpu.memory_space<vmem>>, %arg2: memref<2x256xf32, #tpu.memory_space<vmem>>, %arg3: memref<256x256xbf16, #tpu.memory_space<vmem>>, %arg4: memref<8x256xbf16, #tpu.memory_space<vmem>>) attributes {dimension_semantics = [], scalar_prefetch = 0 : i64, scratch_operands = 0 : i64, tpu.core_type = #tpu.core_type<tc>} {
    %c0 = arith.constant 0 : index
    %c0_0 = arith.constant 0 : index
    %0 = vector.load %arg0[%c0, %c0_0] : memref<8x16xf32, #tpu.memory_space<vmem>>, vector<8x16xf32>
    %1 = arith.truncf %0 : vector<8x16xf32> to vector<8x16xbf16>
    %c0_1 = arith.constant 0 : index
    %c0_2 = arith.constant 0 : index
    %2 = vector.load %arg1[%c0_1, %c0_2] : memref<16x256xbf16, #tpu.memory_space<vmem>>, vector<16x256xbf16>
    %cst = arith.constant dense<0.000000e+00> : vector<8x256xf32>
    %3 = tpu.matmul %1, %2, %cst {dimension_numbers = #tpu.dot_dimension_numbers<[1], [0], [0], [1], [0, 0, 1, 1], [], []>} : vector<8x16xbf16>, vector<16x256xbf16>, vector<8x256xf32> -> vector<8x256xf32>
    %c0_3 = arith.constant 0 : index
    %c0_4 = arith.constant 0 : index
    %4 = vector.load %arg2[%c0_3, %c0_4] : memref<2x256xf32, #tpu.memory_space<vmem>>, vector<1x256xf32>
    %5 = vector.broadcast %4 : vector<1x256xf32> to vector<8x256xf32>
    %6 = arith.addf %3, %5 : vector<8x256xf32>
    %7 = arith.negf %6 : vector<8x256xf32>
    %8 = math.exp %7 : vector<8x256xf32>
    %cst_5 = arith.constant 1.000000e+00 : f32
    %9 = vector.broadcast %cst_5 : f32 to vector<8x256xf32>
    %10 = arith.addf %9, %8 : vector<8x256xf32>
    %11 = arith.divf %9, %10 : vector<8x256xf32>
    %12 = arith.mulf %6, %11 : vector<8x256xf32>
    %13 = arith.truncf %12 : vector<8x256xf32> to vector<8x256xbf16>
    %c0_6 = arith.constant 0 : index
    %c0_7 = arith.constant 0 : index
    %14 = vector.load %arg3[%c0_6, %c0_7] : memref<256x256xbf16, #tpu.memory_space<vmem>>, vector<256x256xbf16>
    %cst_8 = arith.constant dense<0.000000e+00> : vector<8x256xf32>
    %15 = tpu.matmul %13, %14, %cst_8 {dimension_numbers = #tpu.dot_dimension_numbers<[1], [0], [0], [1], [0, 0, 1, 1], [], []>} : vector<8x256xbf16>, vector<256x256xbf16>, vector<8x256xf32> -> vector<8x256xf32>
    %c1 = arith.constant 1 : index
    %c0_9 = arith.constant 0 : index
    %16 = vector.load %arg2[%c1, %c0_9] : memref<2x256xf32, #tpu.memory_space<vmem>>, vector<1x256xf32>
    %17 = vector.broadcast %16 : vector<1x256xf32> to vector<8x256xf32>
    %18 = arith.addf %15, %17 : vector<8x256xf32>
    %19 = arith.truncf %18 : vector<8x256xf32> to vector<8x256xbf16>
    %c0_10 = arith.constant 0 : index
    %c0_11 = arith.constant 0 : index
    %20 = vector.load %arg4[%c0_10, %c0_11] : memref<8x256xbf16, #tpu.memory_space<vmem>>, vector<8x256xbf16>
    tpu.vector_store %arg4[%c0_10, %c0_11], %19 {strides = array<i32>} : memref<8x256xbf16, #tpu.memory_space<vmem>>, vector<8x256xbf16>,
    return
  }
}

</mosaic_0001>

<llo_original>
// kernel: tpu_custom_call.1
$region0: #{tpu_custom_call.1}
  #allocation0 [shape = 'u32[]', space=smem, size = 0x4, offset = 0x4, fixed_abs, tag = 'smem constant byte address 0x4 - core index']
  #allocation1 [shape = 'u32[144,128]{1,0:T(1,128)}', space=vmem, size = 0x12000, scoped, tag = 'internal scratch']
  %s0 = inlined_call_operand.hbm [shape: f32[8,16], index: 0, kind: input, shape index: {}]
  %s1 = inlined_call_operand.hbm [shape: bf16[16,256], index: 1, kind: input, shape index: {}]
  %s2 = inlined_call_operand.hbm [shape: f32[2,256], index: 2, kind: input, shape index: {}]
  %s3 = inlined_call_operand.hbm [shape: bf16[256,256], index: 3, kind: input, shape index: {}]
  %s4 = inlined_call_operand.hbm [shape: bf16[8,256], index: 4, kind: output, shape index: {}]
  %s5 = sld [smem:[#allocation0]]
  $region42: #{tpu_custom_call.1} parent=0
    _
  %s7 = ssub.s32 1, %s5
  %s8 = scalar_select 0, %s7, %s5
  $region1: #{tpu_custom_call.1} parent=0
    #allocation2 [shape = 'u8[4096]{0}', space=vmem, size = 0x1000, scoped, tag = 'input window, operand 0, single buffered']
    #allocation3 [shape = 's32[1]{0}', space=sflag, size = 0x4, scoped, tag = 'scoped memory for tpu_custom_call.1']
    #allocation4 [shape = 's32[1]{0}', space=sflag, size = 0x4, scoped, tag = 'scoped memory for tpu_custom_call.1']
    #allocation5 [shape = 'u8[8192]{0}', space=vmem, size = 0x2000, scoped, tag = 'input window, operand 1, single buffered']
    #allocation6 [shape = 's32[1]{0}', space=sflag, size = 0x4, scoped, tag = 'scoped memory for tpu_custom_call.1']
    #allocation7 [shape = 'u8[2048]{0}', space=vmem, size = 0x800, scoped, tag = 'input window, operand 2, single buffered']
    #allocation8 [shape = 'u8[131072]{0}', space=vmem, size = 0x20000, scoped, tag = 'input window, operand 3, single buffered']
    #allocation9 [shape = 's32[1]{0}', space=sflag, size = 0x4, scoped, tag = 'scoped memory for tpu_custom_call.1']
    #allocation10 [shape = 'u8[4096]{0}', space=vmem, size = 0x1000, scoped, tag = 'output window, operand 0, single buffered']
    %9 = vsyncpa [#allocation3], 0
    %10 = vsyncpa [#allocation6], 0
    %11 = vsyncpa [#allocation9], 0
    %12 = vsyncpa [#allocation4], 0
    // Predicated region
    $region2: #{tpu_custom_call.1} parent=1 // pred_check
      _
    $region3: #{tpu_custom_call.1} parent=1 // pred_check_branch
      %14 = sbr.rel (0) target = $region5
    $region4: #{tpu_custom_call.1} parent=1 // pred_region
      %s16 = ssub.s32 128, 128
      %17 = vsyncadd [#allocation3], %s16
      %s19 = sshll.u32 [#allocation2], 4
      %s20 = int_to_ptr.vmem [resolvable:$true] %s19
      %22 = dma.hbm_to_vmem [thread:$0]  %s0, 128, %s20, [#allocation3]
    $region5: #{tpu_custom_call.1} parent=1 // pred_fallthru
      _
    // Predicated region
    $region6: #{tpu_custom_call.1} parent=1 // pred_check
      _
    $region7: #{tpu_custom_call.1} parent=1 // pred_check_branch
      %24 = sbr.rel (0) target = $region9
    $region8: #{tpu_custom_call.1} parent=1 // pred_region
      %s26 = ssub.s32 256, 256
      %27 = vsyncadd [#allocation6], %s26
      %s28 = sshll.u32 [#allocation5], 4
      %s29 = int_to_ptr.vmem [resolvable:$true] %s28
      %34 = dma.hbm_to_vmem [thread:$0]  %s1, 256, %s29, [#allocation6], 128, 128, 8
    $region9: #{tpu_custom_call.1} parent=1 // pred_fallthru
      _
    // Predicated region
    $region10: #{tpu_custom_call.1} parent=1 // pred_check
      _
    $region11: #{tpu_custom_call.1} parent=1 // pred_check_branch
      %36 = sbr.rel (0) target = $region13
    $region12: #{tpu_custom_call.1} parent=1 // pred_region
      %s38 = ssub.s32 64, 64
      %39 = vsyncadd [#allocation6], %s38
      %s41 = sshll.u32 [#allocation7], 4
      %s42 = int_to_ptr.vmem [resolvable:$true] %s41
      %44 = dma.hbm_to_vmem [thread:$0]  %s2, 64, %s42, [#allocation6]
    $region13: #{tpu_custom_call.1} parent=1 // pred_fallthru
      _
    // Predicated region
    $region14: #{tpu_custom_call.1} parent=1 // pred_check
      _
    $region15: #{tpu_custom_call.1} parent=1 // pred_check_branch
      %46 = sbr.rel (0) target = $region17
    $region16: #{tpu_custom_call.1} parent=1 // pred_region
      %s48 = ssub.s32 4096, 4096
      %49 = vsyncadd [#allocation9], %s48
      %s50 = sshll.u32 [#allocation8], 4
      %s51 = int_to_ptr.vmem [resolvable:$true] %s50
      %56 = dma.hbm_to_vmem [thread:$0]  %s3, 4096, %s51, [#allocation9], 128, 128, 8
    $region17: #{tpu_custom_call.1} parent=1 // pred_fallthru
      _
    // Predicated region
    $region18: #{tpu_custom_call.1} parent=1 // pred_check
      _
    $region19: #{tpu_custom_call.1} parent=1 // pred_check_branch
      %58 = sbr.rel (0) target = $region21
    $region20: #{tpu_custom_call.1} parent=1 // pred_region
      %59 = dma.done [#allocation3], 128
    $region21: #{tpu_custom_call.1} parent=1 // pred_fallthru
      _
    // Predicated region
    $region22: #{tpu_custom_call.1} parent=1 // pred_check
      _
    $region23: #{tpu_custom_call.1} parent=1 // pred_check_branch
      %61 = sbr.rel (0) target = $region25
    $region24: #{tpu_custom_call.1} parent=1 // pred_region
      %62 = dma.done [#allocation6], 256
    $region25: #{tpu_custom_call.1} parent=1 // pred_fallthru
      _
    // Predicated region
    $region26: #{tpu_custom_call.1} parent=1 // pred_check
      _
    $region27: #{tpu_custom_call.1} parent=1 // pred_check_branch
      %64 = sbr.rel (0) target = $region29
    $region28: #{tpu_custom_call.1} parent=1 // pred_region
      %65 = dma.done [#allocation6], 64
    $region29: #{tpu_custom_call.1} parent=1 // pred_fallthru
      _
    // Predicated region
    $region30: #{tpu_custom_call.1} parent=1 // pred_check
      _
    $region31: #{tpu_custom_call.1} parent=1 // pred_check_branch
      %67 = sbr.rel (0) target = $region33
    $region32: #{tpu_custom_call.1} parent=1 // pred_region
      %68 = dma.done [#allocation9], 4096
    $region33: #{tpu_custom_call.1} parent=1 // pred_fallthru
      _
    %v70 = vld [vmem:[#allocation2] sm:$0xff]
    %v71 = vpack.c.bf16 %v70, %v70
    %v72 = vld [vmem:[#allocation5] sm:$0xff]
    %v73 = vld [vmem:[#allocation5 + $0x8] sm:$0xff]
    %v74 = vld [vmem:[#allocation7] ss:$2 sm:$0x3]
    %v76 = vlaneseq
    %v77 = vshrl.u32 %v76, 7
    %v78 = vsub.s32 0, %v77
    %v79 = vrot.slane %v74, %v78
    %v80 = vlaneseq
    %v81 = vshrl.u32 %v80, 7
    %v82 = vsub.s32 1, %v81
    %v83 = vrot.slane %v74, %v82
    %v88 = vunpack.c.l.b16 %v72
    %v89 = vunpack.c.h.b16 %v72
    %v90 = vunpack.c.l.b16 %v73
    %v91 = vunpack.c.h.b16 %v73
    %v92 = vpack.c.b16 %v90, %v88
    %v93 = vpack.c.b16 %v91, %v89
    %vm96 = vcmask 130048
    %v98 = vsel %vm96, %v71, 0
    %100 = vmatprep.subr.bf16.mxu0 0
    %101 = vmatpush1.bf16.msra.mxu0 0
    %102 = vmatprep.subr.bf16.mxu0 0
    %103 = vmatpush1.bf16.msra.mxu0 0
    %104 = vmatprep.subr.bf16.mxu0 0
    %105 = vmatpush1.bf16.msra.mxu0 0
    %106 = vmatprep.subr.bf16.mxu0 0
    %107 = vmatpush1.bf16.msra.mxu0 0
    %108 = vmatprep.subr.bf16.mxu0 0
    %109 = vmatpush1.bf16.msra.mxu0 0
    %110 = vmatprep.subr.bf16.mxu0 0
    %111 = vmatpush1.bf16.msra.mxu0 0
    %112 = vmatprep.subr.bf16.mxu0 0
    %113 = vmatpush1.bf16.msra.mxu0 0
    %114 = vmatprep.subr.bf16.mxu0 %v93
    %115 = vmatpush1.bf16.msra.mxu0 %v92
    %116 = vmatprep.subr.bf16.mxu0 0
    %117 = vmatpush2.bf16.msra.mxu0 0
    %118 = vmatprep.subr.bf16.mxu0 0
    %119 = vmatpush2.bf16.msra.mxu0 0
    %120 = vmatprep.subr.bf16.mxu0 0
    %121 = vmatpush2.bf16.msra.mxu0 0
    %122 = vmatprep.subr.bf16.mxu0 0
    %123 = vmatpush2.bf16.msra.mxu0 0
    %124 = vmatprep.subr.bf16.mxu0 0
    %125 = vmatpush2.bf16.msra.mxu0 0
    %126 = vmatprep.subr.bf16.mxu0 0
    %127 = vmatpush2.bf16.msra.mxu0 0
    %128 = vmatprep.subr.bf16.mxu0 0
    %129 = vmatpush2.bf16.msra.mxu0 0
    %130 = vmatprep.subr.bf16.mxu0 0
    %131 = vmatpush2.bf16.msra.mxu0 0
    %132 = vmatprep.mubr.bf16.mxu0 0
    %133 = vmatmul.mubr.bf16.gmra.mxu0 %v98
    %v134 = vpop.f32.mrf.mxu0
    %v135 = vadd.f32 %v79, %v134
    %v136 = vpop.f32.mrf.mxu0
    %v137 = vadd.f32 %v83, %v136
    %v138 = vpop.f32.mrf.mxu0
    %v139 = vpop.f32.mrf.mxu0
    %140 = vdwg.mxu0
    %v141 = vxor.u32 %v135, 2147483648
    %v142 = vxor.u32 %v137, 2147483648
    %v143 = vmul.f32 %v141, 1.442695
    %v144 = vpow.pop %v143
    %v145 = vmul.f32 %v142, 1.442695
    %v146 = vpow.pop %v145
    %v147 = vadd.f32 %v144, 1.0
    %v148 = vadd.f32 %v146, 1.0
    %v149 = vrcp.pop %v147
    %v150 = vmul.f32 1.0, %v149
    %v151 = vrcp.pop %v148
    %v152 = vmul.f32 1.0, %v151
    %v153 = vmul.f32 %v135, %v150
    %v154 = vmul.f32 %v137, %v152
    %v155 = vpack.c.bf16 %v153, %v153
    %v156 = vpack.c.bf16 %v154, %v154
    %v157 = vld [vmem:[#allocation8] sm:$0xff]
    %v158 = vld [vmem:[#allocation8 + $0x8] sm:$0xff]
    %v159 = vld [vmem:[#allocation8 + $0x10] sm:$0xff]
    %v160 = vld [vmem:[#allocation8 + $0x18] sm:$0xff]
    %v161 = vld [vmem:[#allocation8 + $0x20] sm:$0xff]
    %v162 = vld [vmem:[#allocation8 + $0x28] sm:$0xff]
    %v163 = vld [vmem:[#allocation8 + $0x30] sm:$0xff]
    %v164 = vld [vmem:[#allocation8 + $0x38] sm:$0xff]
    %v165 = vld [vmem:[#allocation8 + $0x40] sm:$0xff]
    %v166 = vld [vmem:[#allocation8 + $0x48] sm:$0xff]
    %v167 = vld [vmem:[#allocation8 + $0x50] sm:$0xff]
    %v168 = vld [vmem:[#allocation8 + $0x58] sm:$0xff]
    %v169 = vld [vmem:[#allocation8 + $0x60] sm:$0xff]
    %v170 = vld [vmem:[#allocation8 + $0x68] sm:$0xff]
    %v171 = vld [vmem:[#allocation8 + $0x70] sm:$0xff]
    %v172 = vld [vmem:[#allocation8 + $0x78] sm:$0xff]
    %v173 = vld [vmem:[#allocation8 + $0x80] sm:$0xff]
    %v174 = vld [vmem:[#allocation8 + $0x88] sm:$0xff]
    %v175 = vld [vmem:[#allocation8 + $0x90] sm:$0xff]
    %v176 = vld [vmem:[#allocation8 + $0x98] sm:$0xff]
    %v177 = vld [vmem:[#allocation8 + $0xa0] sm:$0xff]
    %v178 = vld [vmem:[#allocation8 + $0xa8] sm:$0xff]
    %v179 = vld [vmem:[#allocation8 + $0xb0] sm:$0xff]
    %v180 = vld [vmem:[#allocation8 + $0xb8] sm:$0xff]
    %v181 = vld [vmem:[#allocation8 + $0xc0] sm:$0xff]
    %v182 = vld [vmem:[#allocation8 + $0xc8] sm:$0xff]
    %v183 = vld [vmem:[#allocation8 + $0xd0] sm:$0xff]
    %v184 = vld [vmem:[#allocation8 + $0xd8] sm:$0xff]
    %v185 = vld [vmem:[#allocation8 + $0xe0] sm:$0xff]
    %v186 = vld [vmem:[#allocation8 + $0xe8] sm:$0xff]
    %v187 = vld [vmem:[#allocation8 + $0xf0] sm:$0xff]
    %v188 = vld [vmem:[#allocation8 + $0xf8] sm:$0xff]
    %s189 = scalar_lea.vmem [#allocation7], 1
    %v190 = vld [vmem:[%s189] ss:$2 sm:$0x3]
    %v192 = vlaneseq
    %v193 = vshrl.u32 %v192, 7
    %v194 = vsub.s32 0, %v193
    %v195 = vrot.slane %v190, %v194
    %v196 = vlaneseq
    %v197 = vshrl.u32 %v196, 7
    %v198 = vsub.s32 1, %v197
    %v199 = vrot.slane %v190, %v198
    %v234 = vunpack.c.l.b16 %v157
    %v235 = vunpack.c.h.b16 %v157
    %v236 = vunpack.c.l.b16 %v158
    %v237 = vunpack.c.h.b16 %v158
    %v238 = vunpack.c.l.b16 %v159
    %v239 = vunpack.c.h.b16 %v159
    %v240 = vunpack.c.l.b16 %v160
    %v241 = vunpack.c.h.b16 %v160
    %v242 = vunpack.c.l.b16 %v161
    %v243 = vunpack.c.h.b16 %v161
    %v244 = vunpack.c.l.b16 %v162
    %v245 = vunpack.c.h.b16 %v162
    %v246 = vunpack.c.l.b16 %v163
    %v247 = vunpack.c.h.b16 %v163
    %v248 = vunpack.c.l.b16 %v164
    %v249 = vunpack.c.h.b16 %v164
    %v250 = vunpack.c.l.b16 %v165
    %v251 = vunpack.c.h.b16 %v165
    %v252 = vunpack.c.l.b16 %v166
    %v253 = vunpack.c.h.b16 %v166
    %v254 = vunpack.c.l.b16 %v167
    %v255 = vunpack.c.h.b16 %v167
    %v256 = vunpack.c.l.b16 %v168
    %v257 = vunpack.c.h.b16 %v168
    %v258 = vunpack.c.l.b16 %v169
    %v259 = vunpack.c.h.b16 %v169
    %v260 = vunpack.c.l.b16 %v170
    %v261 = vunpack.c.h.b16 %v170
    %v262 = vunpack.c.l.b16 %v171
    %v263 = vunpack.c.h.b16 %v171
    %v264 = vunpack.c.l.b16 %v172
    %v265 = vunpack.c.h.b16 %v172
    %v266 = vunpack.c.l.b16 %v173
    %v267 = vunpack.c.h.b16 %v173
    %v268 = vunpack.c.l.b16 %v174
    %v269 = vunpack.c.h.b16 %v174
    %v270 = vunpack.c.l.b16 %v175
    %v271 = vunpack.c.h.b16 %v175
    %v272 = vunpack.c.l.b16 %v176
    %v273 = vunpack.c.h.b16 %v176
    %v274 = vunpack.c.l.b16 %v177
    %v275 = vunpack.c.h.b16 %v177
    %v276 = vunpack.c.l.b16 %v178
    %v277 = vunpack.c.h.b16 %v178
    %v278 = vunpack.c.l.b16 %v179
    %v279 = vunpack.c.h.b16 %v179
    %v280 = vunpack.c.l.b16 %v180
    %v281 = vunpack.c.h.b16 %v180
    %v282 = vunpack.c.l.b16 %v181
    %v283 = vunpack.c.h.b16 %v181
    %v284 = vunpack.c.l.b16 %v182
    %v285 = vunpack.c.h.b16 %v182
    %v286 = vunpack.c.l.b16 %v183
    %v287 = vunpack.c.h.b16 %v183
    %v288 = vunpack.c.l.b16 %v184
    %v289 = vunpack.c.h.b16 %v184
    %v290 = vunpack.c.l.b16 %v185
    %v291 = vunpack.c.h.b16 %v185
    %v292 = vunpack.c.l.b16 %v186
    %v293 = vunpack.c.h.b16 %v186
    %v294 = vunpack.c.l.b16 %v187
    %v295 = vunpack.c.h.b16 %v187
    %v296 = vunpack.c.l.b16 %v188
    %v297 = vunpack.c.h.b16 %v188
    %v298 = vpack.c.b16 %v236, %v234
    %v299 = vpack.c.b16 %v237, %v235
    %v300 = vpack.c.b16 %v240, %v238
    %v301 = vpack.c.b16 %v241, %v239
    %v302 = vpack.c.b16 %v244, %v242
    %v303 = vpack.c.b16 %v245, %v243
    %v304 = vpack.c.b16 %v248, %v246
    %v305 = vpack.c.b16 %v249, %v247
    %v306 = vpack.c.b16 %v252, %v250
    %v307 = vpack.c.b16 %v253, %v251
    %v308 = vpack.c.b16 %v256, %v254
    %v309 = vpack.c.b16 %v257, %v255
    %v310 = vpack.c.b16 %v260, %v258
    %v311 = vpack.c.b16 %v261, %v259
    %v312 = vpack.c.b16 %v264, %v262
    %v313 = vpack.c.b16 %v265, %v263
    %v314 = vpack.c.b16 %v268, %v266
    %v315 = vpack.c.b16 %v269, %v267
    %v316 = vpack.c.b16 %v272, %v270
    %v317 = vpack.c.b16 %v273, %v271
    %v318 = vpack.c.b16 %v276, %v274
    %v319 = vpack.c.b16 %v277, %v275
    %v320 = vpack.c.b16 %v280, %v278
    %v321 = vpack.c.b16 %v281, %v279
    %v322 = vpack.c.b16 %v284, %v282
    %v323 = vpack.c.b16 %v285, %v283
    %v324 = vpack.c.b16 %v288, %v286
    %v325 = vpack.c.b16 %v289, %v287
    %v326 = vpack.c.b16 %v292, %v290
    %v327 = vpack.c.b16 %v293, %v291
    %v328 = vpack.c.b16 %v296, %v294
    %v329 = vpack.c.b16 %v297, %v295
    %362 = vmatprep.subr.bf16.mxu0 %v313
    %363 = vmatpush1.bf16.msra.mxu0 %v312
    %364 = vmatprep.subr.bf16.mxu0 %v311
    %365 = vmatpush1.bf16.msra.mxu0 %v310
    %366 = vmatprep.subr.bf16.mxu0 %v309
    %367 = vmatpush1.bf16.msra.mxu0 %v308
    %368 = vmatprep.subr.bf16.mxu0 %v307
    %369 = vmatpush1.bf16.msra.mxu0 %v306
    %370 = vmatprep.subr.bf16.mxu0 %v305
    %371 = vmatpush1.bf16.msra.mxu0 %v304
    %372 = vmatprep.subr.bf16.mxu0 %v303
    %373 = vmatpush1.bf16.msra.mxu0 %v302
    %374 = vmatprep.subr.bf16.mxu0 %v301
    %375 = vmatpush1.bf16.msra.mxu0 %v300
    %376 = vmatprep.subr.bf16.mxu0 %v299
    %377 = vmatpush1.bf16.msra.mxu0 %v298
    %378 = vmatprep.subr.bf16.mxu0 %v329
    %379 = vmatpush2.bf16.msra.mxu0 %v328
    %380 = vmatprep.subr.bf16.mxu0 %v327
    %381 = vmatpush2.bf16.msra.mxu0 %v326
    %382 = vmatprep.subr.bf16.mxu0 %v325
    %383 = vmatpush2.bf16.msra.mxu0 %v324
    %384 = vmatprep.subr.bf16.mxu0 %v323
    %385 = vmatpush2.bf16.msra.mxu0 %v322
    %386 = vmatprep.subr.bf16.mxu0 %v321
    %387 = vmatpush2.bf16.msra.mxu0 %v320
    %388 = vmatprep.subr.bf16.mxu0 %v319
    %389 = vmatpush2.bf16.msra.mxu0 %v318
    %390 = vmatprep.subr.bf16.mxu0 %v317
    %391 = vmatpush2.bf16.msra.mxu0 %v316
    %392 = vmatprep.subr.bf16.mxu0 %v315
    %393 = vmatpush2.bf16.msra.mxu0 %v314
    %394 = vmatprep.mubr.bf16.mxu0 %v156
    %395 = vmatmul.mubr.bf16.gmra.mxu0 %v155
    %v396 = vpop.f32.mrf.mxu0
    %v397 = vadd.f32 %v195, %v396
    %v398 = vpop.f32.mrf.mxu0
    %v399 = vadd.f32 %v199, %v398
    %v400 = vpop.f32.mrf.mxu0
    %v401 = vpop.f32.mrf.mxu0
    %402 = vdwg.mxu0
    %v403 = vpack.c.bf16 %v397, %v397
    %v404 = vpack.c.bf16 %v399, %v399
    %v407 = vunpack.c.l.b16 %v403
    %v408 = vunpack.c.l.b16 %v404
    %v409 = vpack.c.b16 %v408, %v407
    %411 = vst [vmem:[#allocation10] sm:$0xff] %v409
    // Predicated region
    $region34: #{tpu_custom_call.1} parent=1 // pred_check
      _
    $region35: #{tpu_custom_call.1} parent=1 // pred_check_branch
      %413 = sbr.rel (0) target = $region37
    $region36: #{tpu_custom_call.1} parent=1 // pred_region
      %s415 = ssub.s32 128, 128
      %416 = vsyncadd [#allocation4], %s415
      %s418 = sshll.u32 [#allocation10], 4
      %s419 = int_to_ptr.vmem [resolvable:$true] %s418
      %421 = dma.vmem_to_hbm [thread:$0]  %s419, 128, %s4, [#allocation4]
    $region37: #{tpu_custom_call.1} parent=1 // pred_fallthru
      _
    // Predicated region
    $region38: #{tpu_custom_call.1} parent=1 // pred_check
      _
    $region39: #{tpu_custom_call.1} parent=1 // pred_check_branch
      %423 = sbr.rel (0) target = $region41
    $region40: #{tpu_custom_call.1} parent=1 // pred_region
      %424 = dma.done [#allocation4], 128
    $region41: #{tpu_custom_call.1} parent=1 // pred_fallthru
      _
    %425 = vsyncpa [#allocation3], 1
    %426 = vsyncpa [#allocation6], 1
    %427 = vsyncpa [#allocation9], 1
    %428 = vsyncpa [#allocation4], 1

</llo_original>
